<compile_context>
chip_gen: v7x
topology: tpu7x:2x2x1
jax: 0.10.0
libtpu: 0.0.40
codegen_flags: <defaults>
</compile_context>

<pallas_src>
import jax
import jax.numpy as jnp
from jax.experimental import pallas as pl
from jax.experimental.pallas import tpu as pltpu


# ---------------------------------------------------------------------------
# Fused kernel
# ---------------------------------------------------------------------------
def _make_tcn_kernel(n_conv):
    """Fused kernel: n_conv dilated conv+ReLU layers, then mean-pool + 1x1 proj."""

    def kernel(*refs):
        # refs = (x, w_0, b_0, ..., w_{n-1}, b_{n-1}, w_out, b_out, o)
        x_ref = refs[0]
        wout_ref = refs[1 + 2 * n_conv]
        bout_ref = refs[2 + 2 * n_conv]
        o_ref = refs[3 + 2 * n_conv]

        h = x_ref[...].astype(jnp.float32)                     # (TB, L, C0)
        tb = h.shape[0]

        for layer in range(n_conv):
            w = refs[1 + 2 * layer][...]                       # (3*Cin, Cout)
            b = refs[2 + 2 * layer][...]                       # (1, Cout)
            lin, cin = h.shape[1], h.shape[2]
            lout = lin - 2                                     # k=3, d=2, p=1
            # Zero halo built in VMEM (no HBM-side jnp.pad).
            zpad = jnp.zeros((tb, 1, cin), jnp.float32)
            hp = jnp.concatenate([zpad, h, zpad], axis=1)      # (TB, Lin+2, Cin)
            # Fold the 3 dilated taps (padded offsets 0, 2, 4) into one matmul
            # with a 3*Cin contraction dimension (single MXU stream).
            taps = jnp.concatenate(
                [hp[:, 0:lout, :], hp[:, 2:2 + lout, :], hp[:, 4:4 + lout, :]],
                axis=-1)                                       # (TB, Lout, 3*Cin)
            acc = jax.lax.dot_general(
                taps, w,
                dimension_numbers=(((2,), (0,)), ((), ())),
                preferred_element_type=jnp.float32)            # (TB, Lout, Cout)
            h = jnp.maximum(acc + b[:, None, :], 0.0)

        # mean_t(W x_t + b) == W mean_t(x_t) + b  ->  pool first, then project.
        lfin = h.shape[1]
        pooled = jnp.sum(h, axis=1) * (1.0 / lfin)             # (TB, C_last)
        out = jnp.dot(pooled, wout_ref[...],
                      preferred_element_type=jnp.float32)      # (TB, E)
        out = out + bout_ref[...]                              # (1, E) broadcast
        o_ref[...] = out[:, None, :].astype(o_ref.dtype)       # (TB, 1, E)

    return kernel


# ---------------------------------------------------------------------------
# Wrapper: grid/BlockSpec plumbing, tile sizing, cost hints
# ---------------------------------------------------------------------------
def _round_up(v, m):
    return ((v + m - 1) // m) * m


def _per_batch_vmem_bytes(seq_len, channels):
    """Rough f32 VMEM bytes per batch row for all in-kernel activations
    (accounts for (8,128) layout padding of small channel dims)."""
    total = 0
    lc = seq_len
    cin = channels[0]
    total += _round_up(lc, 8) * _round_up(cin, 128)                 # input tile
    for cout in channels[1:]:
        total += _round_up(lc + 2, 8) * _round_up(cin, 128)         # halo copy
        total += _round_up(lc - 2, 8) * _round_up(3 * cin, 128)     # folded taps
        lc -= 2
        total += _round_up(lc, 8) * _round_up(cout, 128)            # layer output
        cin = cout
    return 4 * total


def tcn_encoder_forward(x, params, *, act_vmem_budget_bytes=6 * 1024 * 1024):
    """x: (B, L, input_size) -> (B, embedding_size). Matches TCNEncoder.forward."""
    conv_params = params["convs"]
    w_out, b_out = params["out_w"], params["out_b"]
    n_conv = len(conv_params)
    B, L, C0 = x.shape
    E = w_out.shape[-1]
    assert L - 2 * n_conv >= 1, "sequence too short for the dilated conv stack"

    chans = [C0] + [w.shape[-1] for (w, _) in conv_params]

    # Batch tile: as large as fits the activation budget, but >= 2 grid steps
    # when B >= 2 so a "parallel" axis exists for v7x's two TensorCores.
    per_b = _per_batch_vmem_bytes(L, chans)
    tb_budget = max(1, act_vmem_budget_bytes // per_b)
    if B >= 2:
        tb_budget = min(tb_budget, (B + 1) // 2)
    tb_budget = int(min(tb_budget, B))
    # Prefer a tile that divides B exactly (no padded rows, no extra HBM copy
    # of x); fall back to padding only if no divisor within 2x of the budget.
    tb_div = next((t for t in range(tb_budget, 0, -1) if B % t == 0), 1)
    tb = tb_div if tb_div * 2 >= tb_budget else tb_budget
    Bp = _round_up(B, tb)
    if Bp != B:
        x = jnp.concatenate([x, jnp.zeros((Bp - B, L, C0), x.dtype)], axis=0)
    grid = (Bp // tb,)

    # Inputs: x tiled over batch; weights/biases as full resident blocks.
    flat_inputs = [x]
    in_specs = [pl.BlockSpec((tb, L, C0), lambda i: (i, 0, 0))]
    for (w, b) in conv_params:
        k, cin, cout = w.shape
        wf = w.reshape(k * cin, cout)          # tap-folded weight
        bf = b.reshape(1, cout)
        flat_inputs += [wf, bf]
        in_specs += [
            pl.BlockSpec(wf.shape, lambda i: (0, 0)),
            pl.BlockSpec(bf.shape, lambda i: (0, 0)),
        ]
    flat_inputs += [w_out, b_out.reshape(1, E)]
    in_specs += [
        pl.BlockSpec(w_out.shape, lambda i: (0, 0)),
        pl.BlockSpec((1, E), lambda i: (0, 0)),
    ]
    # Output kept 3D (B, 1, E): batch tile is a free leading dim, store stays
    # lane-dense on E.
    out_spec = pl.BlockSpec((tb, 1, E), lambda i: (i, 0, 0))

    # Advisory cost estimate for the XLA scheduler.
    flops = 0
    lc, cin = L, C0
    for cout in chans[1:]:
        lc -= 2
        flops += 2 * Bp * lc * (3 * cin) * cout
        cin = cout
    flops += Bp * lc * cin + 2 * Bp * cin * E
    bytes_accessed = sum(int(a.size) * 4 for a in flat_inputs) + Bp * E * 4
    cost = pl.CostEstimate(flops=int(flops), transcendentals=0,
                           bytes_accessed=int(bytes_accessed))

    # Explicit VMEM limit: weights + per-step activations + double-buffered IO,
    # with headroom, capped below v7x's 64 MiB physical VMEM.
    weight_bytes = sum(int(a.size) * 4 for a in flat_inputs[1:])
    in_block_bytes = tb * _round_up(L, 8) * _round_up(C0, 128) * 4
    out_block_bytes = tb * 8 * _round_up(E, 128) * 4
    vmem_need = weight_bytes + tb * per_b + 2 * (in_block_bytes + out_block_bytes)
    vmem_limit = int(min(max(2 * vmem_need, 32 * 1024 * 1024), 56 * 1024 * 1024))

    out = pl.pallas_call(
        _make_tcn_kernel(n_conv),
        out_shape=jax.ShapeDtypeStruct((Bp, 1, E), jnp.float32),
        grid_spec=pltpu.PrefetchScalarGridSpec(
            num_scalar_prefetch=0,
            grid=grid,
            in_specs=in_specs,
            out_specs=out_spec,
        ),
        compiler_params=pltpu.CompilerParams(
            dimension_semantics=("parallel",),
            vmem_limit_bytes=vmem_limit,
        ),
        cost_estimate=cost,
    )(*flat_inputs)
    return out[:B, 0, :]


# ---------------------------------------------------------------------------
# Parameter construction (kaiming_normal_, mode='fan_out', relu; biases zero)
# ---------------------------------------------------------------------------
def init_params(key, input_size, embedding_size, num_channels):
    params = {"convs": [], "out_w": None, "out_b": None}
    in_c = input_size
    for out_c in num_channels:
        key, sub = jax.random.split(key)
        std = (2.0 / (out_c * 3)) ** 0.5        # fan_out = Cout * K, gain=sqrt(2)
        w = jax.random.normal(sub, (3, in_c, out_c), jnp.float32) * std
        b = jnp.zeros((out_c,), jnp.float32)
        params["convs"].append((w, b))
        in_c = out_c
    key, sub = jax.random.split(key)
    std = (2.0 / (embedding_size * 1)) ** 0.5
    params["out_w"] = jax.random.normal(sub, (in_c, embedding_size), jnp.float32) * std
    params["out_b"] = jnp.zeros((embedding_size,), jnp.float32)
    return params


# ---------------------------------------------------------------------------
# Pure-JAX reference (for a correctness spot-check)
# ---------------------------------------------------------------------------
def _reference_forward(x, params):
    h = x
    for (w, b) in params["convs"]:
        h = jax.lax.conv_general_dilated(
            h, w, window_strides=(1,), padding=[(1, 1)], rhs_dilation=(2,),
            dimension_numbers=("NWC", "WIO", "NWC"))
        h = jnp.maximum(h + b[None, None, :], 0.0)
    pooled = jnp.mean(h, axis=1)
    return pooled @ params["out_w"] + params["out_b"][None, :]


# ---------------------------------------------------------------------------
if __name__ == "__main__":
    key = jax.random.PRNGKey(0)

    # Small but representative shapes (module-default channel widths and
    # embedding size -> lane-dense 128-wide output and MXU-friendly matmuls).
    batch, seq_len, input_size = 2, 16, 4
    embedding_size = 128
    num_channels = [32, 64, 128]

    pkey, xkey = jax.random.split(key)
    params = init_params(pkey, input_size, embedding_size, num_channels)
    x = jax.random.normal(xkey, (batch, seq_len, input_size), jnp.float32)

    fwd = jax.jit(tcn_encoder_forward)
    out = jax.block_until_ready(fwd(x, params))

    # Sanity: seq shrinks by 2 per dilated conv (16 -> 10), then pooled away.
    assert out.shape == (batch, embedding_size), out.shape
    assert bool(jnp.all(jnp.isfinite(out)))

    ref = _reference_forward(x, params)
    assert bool(jnp.allclose(out, ref, atol=1e-4, rtol=1e-4)), (
        float(jnp.max(jnp.abs(out - ref))))

    print("KERNEL_OK")
</pallas_src>

<mosaic_0001>
module attributes {stable_mosaic.version = 11 : i64} {
  func.func @kernel(%arg0: i32, %arg1: memref<1x16x4xf32, #tpu.memory_space<vmem>>, %arg2: memref<12x32xf32, #tpu.memory_space<vmem>>, %arg3: memref<1x32xf32, #tpu.memory_space<vmem>>, %arg4: memref<96x64xf32, #tpu.memory_space<vmem>>, %arg5: memref<1x64xf32, #tpu.memory_space<vmem>>, %arg6: memref<192x128xf32, #tpu.memory_space<vmem>>, %arg7: memref<1x128xf32, #tpu.memory_space<vmem>>, %arg8: memref<128x128xf32, #tpu.memory_space<vmem>>, %arg9: memref<1x128xf32, #tpu.memory_space<vmem>>, %arg10: memref<1x1x128xf32, #tpu.memory_space<vmem>>) attributes {dimension_semantics = [#tpu.dimension_semantics<parallel>], iteration_bounds = array<i64: 2>, scalar_prefetch = 0 : i64, scratch_operands = 0 : i64, tpu.core_type = #tpu.core_type<tc>, window_params = [{transform_indices = @transform_0, window_bounds = array<i64: 1, 16, 4>}, {pipeline_mode = #tpu.pipeline_mode<synchronous>, transform_indices = @transform_1, window_bounds = array<i64: 12, 32>}, {pipeline_mode = #tpu.pipeline_mode<synchronous>, transform_indices = @transform_2, window_bounds = array<i64: 1, 32>}, {pipeline_mode = #tpu.pipeline_mode<synchronous>, transform_indices = @transform_3, window_bounds = array<i64: 96, 64>}, {pipeline_mode = #tpu.pipeline_mode<synchronous>, transform_indices = @transform_4, window_bounds = array<i64: 1, 64>}, {pipeline_mode = #tpu.pipeline_mode<synchronous>, transform_indices = @transform_5, window_bounds = array<i64: 192, 128>}, {pipeline_mode = #tpu.pipeline_mode<synchronous>, transform_indices = @transform_6, window_bounds = array<i64: 1, 128>}, {pipeline_mode = #tpu.pipeline_mode<synchronous>, transform_indices = @transform_7, window_bounds = array<i64: 128, 128>}, {pipeline_mode = #tpu.pipeline_mode<synchronous>, transform_indices = @transform_8, window_bounds = array<i64: 1, 128>}, {transform_indices = @transform_9, window_bounds = array<i64: 1, 1, 128>}]} {
    %c0 = arith.constant 0 : index
    %c0_0 = arith.constant 0 : index
    %c0_1 = arith.constant 0 : index
    %0 = vector.load %arg1[%c0, %c0_0, %c0_1] : memref<1x16x4xf32, #tpu.memory_space<vmem>>, vector<1x16x4xf32>
    %c0_2 = arith.constant 0 : index
    %c0_3 = arith.constant 0 : index
    %1 = vector.load %arg2[%c0_2, %c0_3] : memref<12x32xf32, #tpu.memory_space<vmem>>, vector<12x32xf32>
    %c0_4 = arith.constant 0 : index
    %c0_5 = arith.constant 0 : index
    %2 = vector.load %arg3[%c0_4, %c0_5] : memref<1x32xf32, #tpu.memory_space<vmem>>, vector<1x32xf32>
    %cst = arith.constant 0.000000e+00 : f32
    %3 = vector.broadcast %cst : f32 to vector<1x1x4xf32>
    %4 = tpu.concatenate %3, %0, %3 in 1 : vector<1x1x4xf32>, vector<1x16x4xf32>, vector<1x1x4xf32> -> vector<1x18x4xf32>
    %5 = vector.extract_strided_slice %4 {offsets = [0, 0, 0], sizes = [1, 14, 4], strides = [1, 1, 1]} : vector<1x18x4xf32> to vector<1x14x4xf32>
    %6 = vector.extract_strided_slice %4 {offsets = [0, 2, 0], sizes = [1, 14, 4], strides = [1, 1, 1]} : vector<1x18x4xf32> to vector<1x14x4xf32>
    %7 = vector.extract_strided_slice %4 {offsets = [0, 4, 0], sizes = [1, 14, 4], strides = [1, 1, 1]} : vector<1x18x4xf32> to vector<1x14x4xf32>
    %8 = tpu.concatenate %5, %6, %7 in 2 : vector<1x14x4xf32>, vector<1x14x4xf32>, vector<1x14x4xf32> -> vector<1x14x12xf32>
    %cst_6 = arith.constant dense<0.000000e+00> : vector<1x14x32xf32>
    %9 = tpu.matmul %8, %1, %cst_6 {dimension_numbers = #tpu.dot_dimension_numbers<[2], [0], [0, 1], [1], [0, 0, 0, 1, 1, 1], [], []>} : vector<1x14x12xf32>, vector<12x32xf32>, vector<1x14x32xf32> -> vector<1x14x32xf32>
    %10 = vector.shape_cast %2 : vector<1x32xf32> to vector<1x1x32xf32>
    %11 = vector.broadcast %10 : vector<1x1x32xf32> to vector<1x14x32xf32>
    %12 = arith.addf %9, %11 : vector<1x14x32xf32>
    %cst_7 = arith.constant 0.000000e+00 : f32
    %13 = vector.broadcast %cst_7 : f32 to vector<1x14x32xf32>
    %14 = arith.maximumf %12, %13 : vector<1x14x32xf32>
    %c0_8 = arith.constant 0 : index
    %c0_9 = arith.constant 0 : index
    %15 = vector.load %arg4[%c0_8, %c0_9] : memref<96x64xf32, #tpu.memory_space<vmem>>, vector<96x64xf32>
    %c0_10 = arith.constant 0 : index
    %c0_11 = arith.constant 0 : index
    %16 = vector.load %arg5[%c0_10, %c0_11] : memref<1x64xf32, #tpu.memory_space<vmem>>, vector<1x64xf32>
    %cst_12 = arith.constant 0.000000e+00 : f32
    %17 = vector.broadcast %cst_12 : f32 to vector<1x1x32xf32>
    %18 = tpu.concatenate %17, %14, %17 in 1 : vector<1x1x32xf32>, vector<1x14x32xf32>, vector<1x1x32xf32> -> vector<1x16x32xf32>
    %19 = vector.extract_strided_slice %18 {offsets = [0, 0, 0], sizes = [1, 12, 32], strides = [1, 1, 1]} : vector<1x16x32xf32> to vector<1x12x32xf32>
    %20 = vector.extract_strided_slice %18 {offsets = [0, 2, 0], sizes = [1, 12, 32], strides = [1, 1, 1]} : vector<1x16x32xf32> to vector<1x12x32xf32>
    %21 = vector.extract_strided_slice %18 {offsets = [0, 4, 0], sizes = [1, 12, 32], strides = [1, 1, 1]} : vector<1x16x32xf32> to vector<1x12x32xf32>
    %22 = tpu.concatenate %19, %20, %21 in 2 : vector<1x12x32xf32>, vector<1x12x32xf32>, vector<1x12x32xf32> -> vector<1x12x96xf32>
    %cst_13 = arith.constant dense<0.000000e+00> : vector<1x12x64xf32>
    %23 = tpu.matmul %22, %15, %cst_13 {dimension_numbers = #tpu.dot_dimension_numbers<[2], [0], [0, 1], [1], [0, 0, 0, 1, 1, 1], [], []>} : vector<1x12x96xf32>, vector<96x64xf32>, vector<1x12x64xf32> -> vector<1x12x64xf32>
    %24 = vector.shape_cast %16 : vector<1x64xf32> to vector<1x1x64xf32>
    %25 = vector.broadcast %24 : vector<1x1x64xf32> to vector<1x12x64xf32>
    %26 = arith.addf %23, %25 : vector<1x12x64xf32>
    %cst_14 = arith.constant 0.000000e+00 : f32
    %27 = vector.broadcast %cst_14 : f32 to vector<1x12x64xf32>
    %28 = arith.maximumf %26, %27 : vector<1x12x64xf32>
    %c0_15 = arith.constant 0 : index
    %c0_16 = arith.constant 0 : index
    %29 = vector.load %arg6[%c0_15, %c0_16] : memref<192x128xf32, #tpu.memory_space<vmem>>, vector<192x128xf32>
    %c0_17 = arith.constant 0 : index
    %c0_18 = arith.constant 0 : index
    %30 = vector.load %arg7[%c0_17, %c0_18] : memref<1x128xf32, #tpu.memory_space<vmem>>, vector<1x128xf32>
    %cst_19 = arith.constant 0.000000e+00 : f32
    %31 = vector.broadcast %cst_19 : f32 to vector<1x1x64xf32>
    %32 = tpu.concatenate %31, %28, %31 in 1 : vector<1x1x64xf32>, vector<1x12x64xf32>, vector<1x1x64xf32> -> vector<1x14x64xf32>
    %33 = vector.extract_strided_slice %32 {offsets = [0, 0, 0], sizes = [1, 10, 64], strides = [1, 1, 1]} : vector<1x14x64xf32> to vector<1x10x64xf32>
    %34 = vector.extract_strided_slice %32 {offsets = [0, 2, 0], sizes = [1, 10, 64], strides = [1, 1, 1]} : vector<1x14x64xf32> to vector<1x10x64xf32>
    %35 = vector.extract_strided_slice %32 {offsets = [0, 4, 0], sizes = [1, 10, 64], strides = [1, 1, 1]} : vector<1x14x64xf32> to vector<1x10x64xf32>
    %36 = tpu.concatenate %33, %34, %35 in 2 : vector<1x10x64xf32>, vector<1x10x64xf32>, vector<1x10x64xf32> -> vector<1x10x192xf32>
    %cst_20 = arith.constant dense<0.000000e+00> : vector<1x10x128xf32>
    %37 = tpu.matmul %36, %29, %cst_20 {dimension_numbers = #tpu.dot_dimension_numbers<[2], [0], [0, 1], [1], [0, 0, 0, 1, 1, 1], [], []>} : vector<1x10x192xf32>, vector<192x128xf32>, vector<1x10x128xf32> -> vector<1x10x128xf32>
    %38 = vector.shape_cast %30 : vector<1x128xf32> to vector<1x1x128xf32>
    %39 = vector.broadcast %38 : vector<1x1x128xf32> to vector<1x10x128xf32>
    %40 = arith.addf %37, %39 : vector<1x10x128xf32>
    %cst_21 = arith.constant 0.000000e+00 : f32
    %41 = vector.broadcast %cst_21 : f32 to vector<1x10x128xf32>
    %42 = arith.maximumf %40, %41 : vector<1x10x128xf32>
    %cst_22 = arith.constant dense<0.000000e+00> : vector<1x128xf32>
    %43 = vector.multi_reduction <add>, %42, %cst_22 [1] : vector<1x10x128xf32> to vector<1x128xf32>
    %cst_23 = arith.constant 1.000000e-01 : f32
    %44 = vector.broadcast %cst_23 : f32 to vector<1x128xf32>
    %45 = arith.mulf %43, %44 : vector<1x128xf32>
    %c0_24 = arith.constant 0 : index
    %c0_25 = arith.constant 0 : index
    %46 = vector.load %arg8[%c0_24, %c0_25] : memref<128x128xf32, #tpu.memory_space<vmem>>, vector<128x128xf32>
    %cst_26 = arith.constant dense<0.000000e+00> : vector<1x128xf32>
    %47 = tpu.matmul %45, %46, %cst_26 {dimension_numbers = #tpu.dot_dimension_numbers<[1], [0], [0], [1], [0, 0, 1, 1], [], []>} : vector<1x128xf32>, vector<128x128xf32>, vector<1x128xf32> -> vector<1x128xf32>
    %c0_27 = arith.constant 0 : index
    %c0_28 = arith.constant 0 : index
    %48 = vector.load %arg9[%c0_27, %c0_28] : memref<1x128xf32, #tpu.memory_space<vmem>>, vector<1x128xf32>
    %49 = arith.addf %47, %48 : vector<1x128xf32>
    %50 = vector.shape_cast %49 : vector<1x128xf32> to vector<1x1x128xf32>
    %c0_29 = arith.constant 0 : index
    %c0_30 = arith.constant 0 : index
    %c0_31 = arith.constant 0 : index
    %51 = vector.load %arg10[%c0_29, %c0_30, %c0_31] : memref<1x1x128xf32, #tpu.memory_space<vmem>>, vector<1x1x128xf32>
    tpu.vector_store %arg10[%c0_29, %c0_30, %c0_31], %50 {strides = array<i32>} : memref<1x1x128xf32, #tpu.memory_space<vmem>>, vector<1x1x128xf32>,
    return
  }
  func.func @transform_0(%arg0: i32) -> (i32, i32, i32) {
    %c0_i32 = arith.constant 0 : i32
    %c0_i32_0 = arith.constant 0 : i32
    %c0_i32_1 = arith.constant 0 : i32
    return %arg0, %c0_i32, %c0_i32_0 : i32, i32, i32
  }
  func.func @transform_1(%arg0: i32) -> (i32, i32) {
    %c0_i32 = arith.constant 0 : i32
    %c0_i32_0 = arith.constant 0 : i32
    %c0_i32_1 = arith.constant 0 : i32
    return %c0_i32, %c0_i32_0 : i32, i32
  }
  func.func @transform_2(%arg0: i32) -> (i32, i32) {
    %c0_i32 = arith.constant 0 : i32
    %c0_i32_0 = arith.constant 0 : i32
    %c0_i32_1 = arith.constant 0 : i32
    return %c0_i32, %c0_i32_0 : i32, i32
  }
  func.func @transform_3(%arg0: i32) -> (i32, i32) {
    %c0_i32 = arith.constant 0 : i32
    %c0_i32_0 = arith.constant 0 : i32
    %c0_i32_1 = arith.constant 0 : i32
    return %c0_i32, %c0_i32_0 : i32, i32
  }
  func.func @transform_4(%arg0: i32) -> (i32, i32) {
    %c0_i32 = arith.constant 0 : i32
    %c0_i32_0 = arith.constant 0 : i32
    %c0_i32_1 = arith.constant 0 : i32
    return %c0_i32, %c0_i32_0 : i32, i32
  }
  func.func @transform_5(%arg0: i32) -> (i32, i32) {
    %c0_i32 = arith.constant 0 : i32
    %c0_i32_0 = arith.constant 0 : i32
    %c0_i32_1 = arith.constant 0 : i32
    return %c0_i32, %c0_i32_0 : i32, i32
  }
  func.func @transform_6(%arg0: i32) -> (i32, i32) {
    %c0_i32 = arith.constant 0 : i32
    %c0_i32_0 = arith.constant 0 : i32
    %c0_i32_1 = arith.constant 0 : i32
    return %c0_i32, %c0_i32_0 : i32, i32
  }
  func.func @transform_7(%arg0: i32) -> (i32, i32) {
    %c0_i32 = arith.constant 0 : i32
    %c0_i32_0 = arith.constant 0 : i32
    %c0_i32_1 = arith.constant 0 : i32
    return %c0_i32, %c0_i32_0 : i32, i32
  }
  func.func @transform_8(%arg0: i32) -> (i32, i32) {
    %c0_i32 = arith.constant 0 : i32
    %c0_i32_0 = arith.constant 0 : i32
    %c0_i32_1 = arith.constant 0 : i32
    return %c0_i32, %c0_i32_0 : i32, i32
  }
  func.func @transform_9(%arg0: i32) -> (i32, i32, i32) {
    %c0_i32 = arith.constant 0 : i32
    %c0_i32_0 = arith.constant 0 : i32
    %c0_i32_1 = arith.constant 0 : i32
    return %arg0, %c0_i32, %c0_i32_0 : i32, i32, i32
  }
}

</mosaic_0001>

<llo_original>
// kernel: tcn_encoder_forward.1
$region0: #{tcn_encoder_forward.1}
  #allocation0 [shape = 'u32[]', space=smem, size = 0x4, offset = 0x4, fixed_abs, tag = 'smem constant byte address 0x4 - core index']
  #allocation1 [shape = 'u32[144,128]{1,0:T(1,128)}', space=vmem, size = 0x12000, scoped, tag = 'internal scratch']
  %s0 = inlined_call_operand.vmem [shape: f32[2,16,4], index: 0, kind: input, shape index: {}]
  %s1 = inlined_call_operand.vmem [shape: f32[12,32], index: 1, kind: input, shape index: {}]
  %s2 = inlined_call_operand.vmem [shape: f32[1,32], index: 2, kind: input, shape index: {}]
  %s3 = inlined_call_operand.vmem [shape: f32[96,64], index: 3, kind: input, shape index: {}]
  %s4 = inlined_call_operand.vmem [shape: f32[1,64], index: 4, kind: input, shape index: {}]
  %s5 = inlined_call_operand.hbm [shape: f32[192,128], index: 5, kind: input, shape index: {}]
  %s6 = inlined_call_operand.vmem [shape: f32[1,128], index: 6, kind: input, shape index: {}]
  %s7 = inlined_call_operand.hbm [shape: f32[128,128], index: 7, kind: input, shape index: {}]
  %s8 = inlined_call_operand.vmem [shape: f32[1,128], index: 8, kind: input, shape index: {}]
  %s9 = inlined_call_operand.hbm [shape: f32[2,1,128], index: 9, kind: output, shape index: {}]
  %s10 = sld [smem:[#allocation0]]
  $region77: #{tcn_encoder_forward.1} parent=0
    _
  %s12 = ssub.s32 1, %s10
  %s13 = scalar_select 0, %s12, %s10
  $region1: #{tcn_encoder_forward.1} parent=0
    #allocation2 [shape = 'u8[98304]{0}', space=vmem, size = 0x18000, scoped, tag = 'input window, operand 5, single buffered']
    #allocation3 [shape = 's32[2]{0}', space=sflag, size = 0x8, scoped, tag = 'scoped memory for tcn_encoder_forward.1']
    #allocation4 [shape = 's32[2]{0}', space=sflag, size = 0x8, scoped, tag = 'scoped memory for tcn_encoder_forward.1']
    #allocation5 [shape = 'u8[65536]{0}', space=vmem, size = 0x10000, scoped, tag = 'input window, operand 7, single buffered']
    #allocation6 [shape = 's32[1]{0}', space=sflag, size = 0x4, scoped, tag = 'scoped memory for tcn_encoder_forward.1']
    #allocation7 [shape = 'u8[1024]{0}', space=vmem, size = 0x400, scoped, tag = 'output window, operand 0']
    %14 = vsyncpa [#allocation3], 0
    %15 = vsyncpa [#allocation6], 0
    %16 = vsyncpa [#allocation4], 0
    %s17 = scalar_lea.sflag [#allocation4], 1
    %18 = vsyncpa %s17, 0
    loop: start=0, step=1, limit=4
    $region2: #{tcn_encoder_forward.1} parent=1 // loop_pre_header
      _
    $region3: #{tcn_encoder_forward.1} parent=1 // loop_header
      %s20 = sphi 0, %s24
      %p21 = scmp.ge.s32.totalorder %s20, 4
      %s30 = sphi 0, %s32
      %s33 = sphi 0, %s30
      %s34 = sphi 0, %s33
      %s50 = sphi 0, %s34
      %s54 = sphi 0, %s54
      %s56 = sphi 0, %s54
      %s57 = sphi 0, %s56
      %s71 = sphi 0, %s57
      %s75 = sphi 0, %s75
      %s77 = sphi 0, %s75
      %s78 = sphi 0, %s77
      %s92 = sphi 0, %s78
      %s96 = sphi 0, %s96
      %s98 = sphi 0, %s96
      %s99 = sphi 0, %s98
      %s113 = sphi 0, %s99
      %s117 = sphi 0, %s117
      %s119 = sphi 0, %s117
      %s120 = sphi 0, %s119
      %s134 = sphi 0, %s120
      %s138 = sphi 0, %s138
      %s140 = sphi 0, %s138
      %s141 = sphi 0, %s140
      %s155 = sphi 0, %s141
      %s159 = sphi 0, %s159
      %s161 = sphi 0, %s159
      %s162 = sphi 0, %s161
      %s176 = sphi 0, %s162
      %s180 = sphi 0, %s180
      %s182 = sphi 0, %s180
      %s183 = sphi 0, %s182
      %s197 = sphi 0, %s183
      %s201 = sphi 0, %s201
      %s203 = sphi 0, %s201
      %s204 = sphi 0, %s203
      %s218 = sphi 0, %s204
      %s224 = sphi 0, %s226
      %s227 = sphi 0, %s224
      %s228 = sphi 0, %s227
      %s244 = sphi 0, %s228
    $region4: #{tcn_encoder_forward.1} parent=1 // loop_header_branch
      %23 = sbr.rel (%p21) target = $region8
    $region5: #{tcn_encoder_forward.1} parent=1 // loop_body
      %s25 = ssub.s32 %s20, 1
      %s26 = ssub.s32 %s20, 2
      %s27 = sadd.s32 %s20, 1
      %s28 = ssub.s32 %s20, %s27
      %p29 = scmp.eq.s32.totalorder %s28, 0
      %s31 = sadd.s32 %s30, 1
      %s32 = scalar_select %p29, %s30, %s31
      %p35 = pneg %p29
      %p36 = scmp.eq.s32.totalorder %s20, 1
      %p37 = por %p35, %p36
      %p38 = scmp.ne.s32.totalorder %s30, %s33
      %p39 = scmp.eq.s32.totalorder %s20, 0
      %p40 = por %p38, %p39
      %p41 = scmp.ne.s32.totalorder %s30, %s33
      %p42 = scmp.eq.s32.totalorder %s25, 1
      %p43 = por %p41, %p42
      %p44 = scmp.ne.s32.totalorder %s33, %s34
      %p45 = scmp.eq.s32.totalorder %s25, 0
      %p46 = por %p44, %p45
      %p47 = scmp.ne.s32.totalorder %s33, %s34
      %p48 = scmp.eq.s32.totalorder %s26, 1
      %p49 = por %p47, %p48
      %p51 = scmp.ne.s32.totalorder %s34, %s50
      %p52 = scmp.eq.s32.totalorder %s26, 0
      %p53 = por %p51, %p52
      %s55 = sadd.s32 %s54, 1
      %p58 = scmp.eq.s32.totalorder %s20, 1
      %p59 = scmp.ne.s32.totalorder %s54, %s56
      %p60 = scmp.eq.s32.totalorder %s20, 0
      %p61 = por %p59, %p60
      %p62 = scmp.ne.s32.totalorder %s54, %s56
      %p63 = scmp.eq.s32.totalorder %s25, 1
      %p64 = por %p62, %p63
      %p65 = scmp.ne.s32.totalorder %s56, %s57
      %p66 = scmp.eq.s32.totalorder %s25, 0
      %p67 = por %p65, %p66
      %p68 = scmp.ne.s32.totalorder %s56, %s57
      %p69 = scmp.eq.s32.totalorder %s26, 1
      %p70 = por %p68, %p69
      %p72 = scmp.ne.s32.totalorder %s57, %s71
      %p73 = scmp.eq.s32.totalorder %s26, 0
      %p74 = por %p72, %p73
      %s76 = sadd.s32 %s75, 1
      %p79 = scmp.eq.s32.totalorder %s20, 1
      %p80 = scmp.ne.s32.totalorder %s75, %s77
      %p81 = scmp.eq.s32.totalorder %s20, 0
      %p82 = por %p80, %p81
      %p83 = scmp.ne.s32.totalorder %s75, %s77
      %p84 = scmp.eq.s32.totalorder %s25, 1
      %p85 = por %p83, %p84
      %p86 = scmp.ne.s32.totalorder %s77, %s78
      %p87 = scmp.eq.s32.totalorder %s25, 0
      %p88 = por %p86, %p87
      %p89 = scmp.ne.s32.totalorder %s77, %s78
      %p90 = scmp.eq.s32.totalorder %s26, 1
      %p91 = por %p89, %p90
      %p93 = scmp.ne.s32.totalorder %s78, %s92
      %p94 = scmp.eq.s32.totalorder %s26, 0
      %p95 = por %p93, %p94
      %s97 = sadd.s32 %s96, 1
      %p100 = scmp.eq.s32.totalorder %s20, 1
      %p101 = scmp.ne.s32.totalorder %s96, %s98
      %p102 = scmp.eq.s32.totalorder %s20, 0
      %p103 = por %p101, %p102
      %p104 = scmp.ne.s32.totalorder %s96, %s98
      %p105 = scmp.eq.s32.totalorder %s25, 1
      %p106 = por %p104, %p105
      %p107 = scmp.ne.s32.totalorder %s98, %s99
      %p108 = scmp.eq.s32.totalorder %s25, 0
      %p109 = por %p107, %p108
      %p110 = scmp.ne.s32.totalorder %s98, %s99
      %p111 = scmp.eq.s32.totalorder %s26, 1
      %p112 = por %p110, %p111
      %p114 = scmp.ne.s32.totalorder %s99, %s113
      %p115 = scmp.eq.s32.totalorder %s26, 0
      %p116 = por %p114, %p115
      %s118 = sadd.s32 %s117, 1
      %p121 = scmp.eq.s32.totalorder %s20, 1
      %p122 = scmp.ne.s32.totalorder %s117, %s119
      %p123 = scmp.eq.s32.totalorder %s20, 0
      %p124 = por %p122, %p123
      %p125 = scmp.ne.s32.totalorder %s117, %s119
      %p126 = scmp.eq.s32.totalorder %s25, 1
      %p127 = por %p125, %p126
      %p128 = scmp.ne.s32.totalorder %s119, %s120
      %p129 = scmp.eq.s32.totalorder %s25, 0
      %p130 = por %p128, %p129
      %p131 = scmp.ne.s32.totalorder %s119, %s120
      %p132 = scmp.eq.s32.totalorder %s26, 1
      %p133 = por %p131, %p132
      %p135 = scmp.ne.s32.totalorder %s120, %s134
      %p136 = scmp.eq.s32.totalorder %s26, 0
      %p137 = por %p135, %p136
      %s139 = sadd.s32 %s138, 1
      %p142 = scmp.eq.s32.totalorder %s20, 1
      %p143 = scmp.ne.s32.totalorder %s138, %s140
      %p144 = scmp.eq.s32.totalorder %s20, 0
      %p145 = por %p143, %p144
      %p146 = scmp.ne.s32.totalorder %s138, %s140
      %p147 = scmp.eq.s32.totalorder %s25, 1
      %p148 = por %p146, %p147
      %p149 = scmp.ne.s32.totalorder %s140, %s141
      %p150 = scmp.eq.s32.totalorder %s25, 0
      %p151 = por %p149, %p150
      %p152 = scmp.ne.s32.totalorder %s140, %s141
      %p153 = scmp.eq.s32.totalorder %s26, 1
      %p154 = por %p152, %p153
      %p156 = scmp.ne.s32.totalorder %s141, %s155
      %p157 = scmp.eq.s32.totalorder %s26, 0
      %p158 = por %p156, %p157
      %s160 = sadd.s32 %s159, 1
      %p163 = scmp.eq.s32.totalorder %s20, 1
      %p164 = scmp.ne.s32.totalorder %s159, %s161
      %p165 = scmp.eq.s32.totalorder %s20, 0
      %p166 = por %p164, %p165
      %p167 = scmp.ne.s32.totalorder %s159, %s161
      %p168 = scmp.eq.s32.totalorder %s25, 1
      %p169 = por %p167, %p168
      %p170 = scmp.ne.s32.totalorder %s161, %s162
      %p171 = scmp.eq.s32.totalorder %s25, 0
      %p172 = por %p170, %p171
      %p173 = scmp.ne.s32.totalorder %s161, %s162
      %p174 = scmp.eq.s32.totalorder %s26, 1
      %p175 = por %p173, %p174
      %p177 = scmp.ne.s32.totalorder %s162, %s176
      %p178 = scmp.eq.s32.totalorder %s26, 0
      %p179 = por %p177, %p178
      %s181 = sadd.s32 %s180, 1
      %p184 = scmp.eq.s32.totalorder %s20, 1
      %p185 = scmp.ne.s32.totalorder %s180, %s182
      %p186 = scmp.eq.s32.totalorder %s20, 0
      %p187 = por %p185, %p186
      %p188 = scmp.ne.s32.totalorder %s180, %s182
      %p189 = scmp.eq.s32.totalorder %s25, 1
      %p190 = por %p188, %p189
      %p191 = scmp.ne.s32.totalorder %s182, %s183
      %p192 = scmp.eq.s32.totalorder %s25, 0
      %p193 = por %p191, %p192
      %p194 = scmp.ne.s32.totalorder %s182, %s183
      %p195 = scmp.eq.s32.totalorder %s26, 1
      %p196 = por %p194, %p195
      %p198 = scmp.ne.s32.totalorder %s183, %s197
      %p199 = scmp.eq.s32.totalorder %s26, 0
      %p200 = por %p198, %p199
      %s202 = sadd.s32 %s201, 1
      %p205 = scmp.eq.s32.totalorder %s20, 1
      %p206 = scmp.ne.s32.totalorder %s201, %s203
      %p207 = scmp.eq.s32.totalorder %s20, 0
      %p208 = por %p206, %p207
      %p209 = scmp.ne.s32.totalorder %s201, %s203
      %p210 = scmp.eq.s32.totalorder %s25, 1
      %p211 = por %p209, %p210
      %p212 = scmp.ne.s32.totalorder %s203, %s204
      %p213 = scmp.eq.s32.totalorder %s25, 0
      %p214 = por %p212, %p213
      %p215 = scmp.ne.s32.totalorder %s203, %s204
      %p216 = scmp.eq.s32.totalorder %s26, 1
      %p217 = por %p215, %p216
      %p219 = scmp.ne.s32.totalorder %s204, %s218
      %p220 = scmp.eq.s32.totalorder %s26, 0
      %p221 = por %p219, %p220
      %s222 = ssub.s32 %s20, %s27
      %p223 = scmp.eq.s32.totalorder %s222, 0
      %s225 = sadd.s32 %s224, 1
      %s226 = scalar_select %p223, %s224, %s225
      %p229 = pneg %p223
      %p230 = scmp.eq.s32.totalorder %s20, 1
      %p231 = por %p229, %p230
      %p232 = scmp.ne.s32.totalorder %s224, %s227
      %p233 = scmp.eq.s32.totalorder %s20, 0
      %p234 = por %p232, %p233
      %p235 = scmp.ne.s32.totalorder %s224, %s227
      %p236 = scmp.eq.s32.totalorder %s25, 1
      %p237 = por %p235, %p236
      %p238 = scmp.ne.s32.totalorder %s227, %s228
      %p239 = scmp.eq.s32.totalorder %s25, 0
      %p240 = por %p238, %p239
      %p241 = scmp.ne.s32.totalorder %s227, %s228
      %p242 = scmp.eq.s32.totalorder %s26, 1
      %p243 = por %p241, %p242
      %p245 = scmp.ne.s32.totalorder %s228, %s244
      %p246 = scmp.eq.s32.totalorder %s26, 0
      %p247 = por %p245, %p246
      %p248 = scmp.le.s32.totalorder 1, %s20
      %p249 = scmp.lt.s32.totalorder %s20, 3
      %p250 = pnand %p248, %p249
      %p251 = pneg %p250
      // Predicated region
      $region9: #{tcn_encoder_forward.1} parent=5 // pred_check
        _
      $region10: #{tcn_encoder_forward.1} parent=5 // pred_check_branch
        %253 = sbr.rel (%p250) target = $region12
      $region11: #{tcn_encoder_forward.1} parent=5 // pred_region
        %s254 = ssub.s32 %s20, 1
        // Predicated region
        $region13: #{tcn_encoder_forward.1} parent=11 // pred_check
          %p255 = pneg %p67
        $region14: #{tcn_encoder_forward.1} parent=11 // pred_check_branch
          %257 = sbr.rel (%p255) target = $region16
        $region15: #{tcn_encoder_forward.1} parent=11 // pred_region
          _
        $region16: #{tcn_encoder_forward.1} parent=11 // pred_fallthru
          _
        // Predicated region
        $region17: #{tcn_encoder_forward.1} parent=11 // pred_check
          %p258 = pneg %p88
        $region18: #{tcn_encoder_forward.1} parent=11 // pred_check_branch
          %260 = sbr.rel (%p258) target = $region20
        $region19: #{tcn_encoder_forward.1} parent=11 // pred_region
          _
        $region20: #{tcn_encoder_forward.1} parent=11 // pred_fallthru
          _
        // Predicated region
        $region21: #{tcn_encoder_forward.1} parent=11 // pred_check
          %p261 = pneg %p109
        $region22: #{tcn_encoder_forward.1} parent=11 // pred_check_branch
          %263 = sbr.rel (%p261) target = $region24
        $region23: #{tcn_encoder_forward.1} parent=11 // pred_region
          _
        $region24: #{tcn_encoder_forward.1} parent=11 // pred_fallthru
          _
        // Predicated region
        $region25: #{tcn_encoder_forward.1} parent=11 // pred_check
          %p264 = pneg %p130
        $region26: #{tcn_encoder_forward.1} parent=11 // pred_check_branch
          %266 = sbr.rel (%p264) target = $region28
        $region27: #{tcn_encoder_forward.1} parent=11 // pred_region
          _
        $region28: #{tcn_encoder_forward.1} parent=11 // pred_fallthru
          _
        // Predicated region
        $region29: #{tcn_encoder_forward.1} parent=11 // pred_check
          %p267 = pneg %p151
        $region30: #{tcn_encoder_forward.1} parent=11 // pred_check_branch
          %269 = sbr.rel (%p267) target = $region32
        $region31: #{tcn_encoder_forward.1} parent=11 // pred_region
          %s271 = ssub.s32 3072, 3072
          %272 = vsyncadd [#allocation3], %s271
          %s273 = sshll.u32 [#allocation2], 4
          %s274 = int_to_ptr.vmem [resolvable:$true] %s273
          %279 = dma.hbm_to_vmem [thread:$0]  %s5, 3072, %s274, [#allocation3], 128, 128, 8
        $region32: #{tcn_encoder_forward.1} parent=11 // pred_fallthru
          _
        // Predicated region
        $region33: #{tcn_encoder_forward.1} parent=11 // pred_check
          %p280 = pneg %p172
        $region34: #{tcn_encoder_forward.1} parent=11 // pred_check_branch
          %282 = sbr.rel (%p280) target = $region36
        $region35: #{tcn_encoder_forward.1} parent=11 // pred_region
          _
        $region36: #{tcn_encoder_forward.1} parent=11 // pred_fallthru
          _
        // Predicated region
        $region37: #{tcn_encoder_forward.1} parent=11 // pred_check
          %p283 = pneg %p193
        $region38: #{tcn_encoder_forward.1} parent=11 // pred_check_branch
          %285 = sbr.rel (%p283) target = $region40
        $region39: #{tcn_encoder_forward.1} parent=11 // pred_region
          %s287 = ssub.s32 2048, 2048
          %288 = vsyncadd [#allocation6], %s287
          %s289 = sshll.u32 [#allocation5], 4
          %s290 = int_to_ptr.vmem [resolvable:$true] %s289
          %295 = dma.hbm_to_vmem [thread:$0]  %s7, 2048, %s290, [#allocation6], 128, 128, 8
        $region40: #{tcn_encoder_forward.1} parent=11 // pred_fallthru
          _
        // Predicated region
        $region41: #{tcn_encoder_forward.1} parent=11 // pred_check
          %p296 = pneg %p214
        $region42: #{tcn_encoder_forward.1} parent=11 // pred_check_branch
          %298 = sbr.rel (%p296) target = $region44
        $region43: #{tcn_encoder_forward.1} parent=11 // pred_region
          _
        $region44: #{tcn_encoder_forward.1} parent=11 // pred_fallthru
          _
      $region12: #{tcn_encoder_forward.1} parent=5 // pred_fallthru
        _
      %p299 = scmp.lt.s32.totalorder %s20, 2
      // Predicated region
      $region45: #{tcn_encoder_forward.1} parent=5 // pred_check
        %p300 = pneg %p299
      $region46: #{tcn_encoder_forward.1} parent=5 // pred_check_branch
        %302 = sbr.rel (%p300) target = $region48
      $region47: #{tcn_encoder_forward.1} parent=5 // pred_region
        // Predicated region
        $region49: #{tcn_encoder_forward.1} parent=47 // pred_check
          %p303 = pneg %p40
        $region50: #{tcn_encoder_forward.1} parent=47 // pred_check_branch
          %305 = sbr.rel (%p303) target = $region52
        $region51: #{tcn_encoder_forward.1} parent=47 // pred_region
          %p306 = scmp.lt.s32.totalorder %s20, 1
          %s307 = scalar_select %p306, %s20, 1
          %s308 = smul.addr %s307, 2
          %s309 = smul.addr %s308, 8
          %s310 = scalar_lea.vmem %s0, %s309
        $region52: #{tcn_encoder_forward.1} parent=47 // pred_fallthru
          _
      $region48: #{tcn_encoder_forward.1} parent=5 // pred_fallthru
        _
      %p311 = scmp.le.s32.totalorder 1, %s20
      %p312 = scmp.lt.s32.totalorder %s20, 3
      %p313 = pnand %p311, %p312
      %p314 = pneg %p313
      // Predicated region
      $region53: #{tcn_encoder_forward.1} parent=5 // pred_check
        _
      $region54: #{tcn_encoder_forward.1} parent=5 // pred_check_branch
        %316 = sbr.rel (%p313) target = $region56
      $region55: #{tcn_encoder_forward.1} parent=5 // pred_region
        %s317 = ssub.s32 %s20, 1
        // Predicated region
        $region57: #{tcn_encoder_forward.1} parent=55 // pred_check
          %p318 = pneg %p151
        $region58: #{tcn_encoder_forward.1} parent=55 // pred_check_branch
          %320 = sbr.rel (%p318) target = $region60
        $region59: #{tcn_encoder_forward.1} parent=55 // pred_region
          %321 = dma.done [#allocation3], 3072
        $region60: #{tcn_encoder_forward.1} parent=55 // pred_fallthru
          _
        // Predicated region
        $region61: #{tcn_encoder_forward.1} parent=55 // pred_check
          %p322 = pneg %p193
        $region62: #{tcn_encoder_forward.1} parent=55 // pred_check_branch
          %324 = sbr.rel (%p322) target = $region64
        $region63: #{tcn_encoder_forward.1} parent=55 // pred_region
          %325 = dma.done [#allocation6], 2048
        $region64: #{tcn_encoder_forward.1} parent=55 // pred_fallthru
          _
        %p326 = scmp.lt.s32.totalorder %s25, 1
        %s327 = scalar_select %p326, %s25, 1
        %s328 = smul.addr %s327, 2
        %s329 = smul.addr %s328, 8
        %s330 = scalar_lea.vmem %s0, %s329
        %p331 = pneg %p46
        %p332 = pneg %p43
        %p333 = pneg %p67
        %p334 = pneg %p64
        %p335 = pneg %p88
        %p336 = pneg %p85
        %p337 = pneg %p109
        %p338 = pneg %p106
        %p339 = pneg %p130
        %p340 = pneg %p127
        %p341 = pneg %p151
        %p342 = pneg %p148
        %p343 = pneg %p172
        %p344 = pneg %p169
        %p345 = pneg %p193
        %p346 = pneg %p190
        %p347 = pneg %p214
        %p348 = pneg %p211
        %p349 = pneg %p240
        %p350 = pneg %p237
        %s351 = sand.u32 %s227, 1
        %s352 = scalar_lea.sflag [#allocation4], %s351
        %s353 = sand.u32 %s227, 1
        %s354 = scalar_lea.vmem [#allocation7], %s353
        %p355 = scmp.lt.s32.totalorder %s25, 1
        %s356 = scalar_select %p355, %s25, 1
        %s357 = smul.addr %s356, 2
        %s358 = smul.addr %s357, 8
        %s359 = scalar_lea.vmem %s0, %s358
        %v360 = vld [vmem:[%s359] sm:$0xff]
        %v361 = vld [vmem:[%s359 + $0x8] sm:$0xff]
        %v362 = vld [vmem:[%s1] sm:$0xff]
        %v363 = vld [vmem:[%s1 + $0x8] sm:$0xf]
        %v364 = vld [vmem:[%s2] sm:$0x1]
        %vm367 = vcmask 1040384
        %v368 = vrot.slane %v360, 7
        %v369 = vrot.slane %v361, 7
        %v370 = vsel %vm367, %v368, %v369
        %v374 = vsel %vm367, 0.0, %v368
        %v375 = vsel %vm367, %v369, 0.0
        %vm377 = vcmask 1045504
        %v378 = vrot.slane %v374, 2
        %v379 = vrot.slane %v370, 2
        %v380 = vsel %vm377, %v378, %v379
        %381 = vrot.lane.b32.xlu0 %v380, 4
        %v382 = vpop.permute.xlu0 %381
        %383 = vrot.lane.b32.xlu0 %v379, 4
        %v384 = vpop.permute.xlu0 %383
        %vm388 = vcmask 1043456
        %v389 = vrot.slane %v374, 4
        %v390 = vrot.slane %v370, 4
        %v391 = vsel %vm388, %v389, %v390
        %v392 = vrot.slane %v375, 4
        %v393 = vsel %vm388, %v390, %v392
        %394 = vrot.lane.b32.xlu0 %v391, 8
        %v395 = vpop.permute.xlu0 %394
        %396 = vrot.lane.b32.xlu0 %v393, 8
        %v397 = vpop.permute.xlu0 %396
        %vm400 = vcmask 31744
        %v401 = vsel %vm400, %v374, %v382
        %v402 = vsel %vm400, %v370, %v384
        %vm403 = vcmask 64512
        %v404 = vsel %vm403, %v401, %v395
        %v405 = vsel %vm403, %v402, %v397
        %v407 = vlaneseq
        %v408 = vshrl.u32 %v407, 7
        %v409 = vsub.s32 0, %v408
        %v410 = vrot.slane %v364, %v409
        %vm412 = vcmask 97280
        %v414 = vsel %vm412, %v404, 0
        %v417 = vsel %vm412, %v405, 0
        %v420 = vsel %vm388, %v363, 0
        %422 = vmatprep.subr.mxu0 0.0
        %423 = vmatpush1.msra.mxu0 %v362
        %424 = vmatprep.subr.mxu0 0.0
        %425 = vmatpush1.msra.mxu0 %v420
        %426 = vmatprep.subr.mxu0 0.0
        %427 = vmatpush1.msra.mxu0 0.0
        %428 = vmatprep.subr.mxu0 0.0
        %429 = vmatpush1.msra.mxu0 0.0
        %430 = vmatprep.subr.mxu0 0.0
        %431 = vmatpush1.msra.mxu0 0.0
        %432 = vmatprep.subr.mxu0 0.0
        %433 = vmatpush1.msra.mxu0 0.0
        %434 = vmatprep.subr.mxu0 0.0
        %435 = vmatpush1.msra.mxu0 0.0
        %436 = vmatprep.subr.mxu0 0.0
        %437 = vmatpush1.msra.mxu0 0.0
        %438 = vmatprep.subr.mxu0 0.0
        %439 = vmatpush1.msra.mxu0 0.0
        %440 = vmatprep.subr.mxu0 0.0
        %441 = vmatpush1.msra.mxu0 0.0
        %442 = vmatprep.subr.mxu0 0.0
        %443 = vmatpush1.msra.mxu0 0.0
        %444 = vmatprep.subr.mxu0 0.0
        %445 = vmatpush1.msra.mxu0 0.0
        %446 = vmatprep.subr.mxu0 0.0
        %447 = vmatpush1.msra.mxu0 0.0
        %448 = vmatprep.subr.mxu0 0.0
        %449 = vmatpush1.msra.mxu0 0.0
        %450 = vmatprep.subr.mxu0 0.0
        %451 = vmatpush1.msra.mxu0 0.0
        %452 = vmatprep.subr.mxu0 0.0
        %453 = vmatpush1.msra.mxu0 0.0
        %454 = vmatprep.subr.mxu0 0.0
        %455 = vmatpush1.msra.mxu0 0.0
        %456 = vmatprep.subr.mxu0 0.0
        %457 = vmatpush1.msra.mxu0 0.0
        %458 = vmatprep.subr.mxu0 0.0
        %459 = vmatpush1.msra.mxu0 0.0
        %460 = vmatprep.subr.mxu0 0.0
        %461 = vmatpush1.msra.mxu0 0.0
        %462 = vmatprep.subr.mxu0 0.0
        %463 = vmatpush1.msra.mxu0 0.0
        %464 = vmatprep.subr.mxu0 0.0
        %465 = vmatpush1.msra.mxu0 0.0
        %466 = vmatprep.subr.mxu0 0.0
        %467 = vmatpush1.msra.mxu0 0.0
        %468 = vmatprep.subr.mxu0 0.0
        %469 = vmatpush1.msra.mxu0 0.0
        %470 = vmatprep.subr.mxu0 0.0
        %471 = vmatpush1.msra.mxu0 0.0
        %472 = vmatprep.subr.mxu0 0.0
        %473 = vmatpush1.msra.mxu0 0.0
        %474 = vmatprep.subr.mxu0 0.0
        %475 = vmatpush1.msra.mxu0 0.0
        %476 = vmatprep.subr.mxu0 0.0
        %477 = vmatpush1.msra.mxu0 0.0
        %478 = vmatprep.subr.mxu0 0.0
        %479 = vmatpush1.msra.mxu0 0.0
        %480 = vmatprep.subr.mxu0 0.0
        %481 = vmatpush1.msra.mxu0 0.0
        %482 = vmatprep.subr.mxu0 0.0
        %483 = vmatpush1.msra.mxu0 0.0
        %484 = vmatprep.subr.mxu0 0.0
        %485 = vmatpush1.msra.mxu0 0.0
        %486 = vmatprep.mubr.f32.mxu0 0.0
        %487 = vmatmul.mubr.f32.gmra.mrb[0].mxu0 %v414
        %v488 = vpop.f32.mrb[0].mxu0
        %v489 = vadd.f32 %v410, %v488
        %v490 = vpop.f32.mrb[0].mxu0
        %491 = vmatprep.mubr.f32.mxu0 0.0
        %492 = vmatmul.mubr.f32.gmra.mrb[0].mxu0 %v417
        %v493 = vpop.f32.mrb[0].mxu0
        %v494 = vadd.f32 %v410, %v493
        %v495 = vpop.f32.mrb[0].mxu0
        %496 = vdwg.mxu0
        %v497 = vmax.f32 %v489, 0.0
        %v498 = vmax.f32 %v494, 0.0
        %v499 = vld [vmem:[%s3] sm:$0xff]
        %v500 = vld [vmem:[%s3 + $0x8] sm:$0xff]
        %v501 = vld [vmem:[%s3 + $0x10] sm:$0xff]
        %v502 = vld [vmem:[%s3 + $0x18] sm:$0xff]
        %v503 = vld [vmem:[%s3 + $0x20] sm:$0xff]
        %v504 = vld [vmem:[%s3 + $0x28] sm:$0xff]
        %v505 = vld [vmem:[%s3 + $0x30] sm:$0xff]
        %v506 = vld [vmem:[%s3 + $0x38] sm:$0xff]
        %v507 = vld [vmem:[%s3 + $0x40] sm:$0xff]
        %v508 = vld [vmem:[%s3 + $0x48] sm:$0xff]
        %v509 = vld [vmem:[%s3 + $0x50] sm:$0xff]
        %v510 = vld [vmem:[%s3 + $0x58] sm:$0xff]
        %v511 = vld [vmem:[%s4] sm:$0x1]
        %v514 = vrot.slane %v497, 7
        %v515 = vrot.slane %v498, 7
        %v516 = vsel %vm367, %v514, %v515
        %v519 = vsel %vm367, 0.0, %v514
        %vm520 = vcmask 1046528
        %v521 = vsel %vm520, %v516, 0.0
        %v524 = vrot.slane %v519, 2
        %v525 = vrot.slane %v521, 2
        %v526 = vsel %vm377, %v524, %v525
        %527 = vrot.lane.b32.xlu0 %v526, 32
        %v528 = vpop.permute.xlu0 %527
        %529 = vrot.lane.b32.xlu0 %v525, 32
        %v530 = vpop.permute.xlu0 %529
        %v533 = vrot.slane %v519, 4
        %v534 = vrot.slane %v521, 4
        %v535 = vsel %vm388, %v533, %v534
        %536 = vrot.lane.b32.xlu0 %v535, 64
        %v537 = vpop.permute.xlu0 %536
        %538 = vrot.lane.b32.xlu0 %v534, 64
        %v539 = vpop.permute.xlu0 %538
        %vm542 = vcmask 261120
        %v543 = vsel %vm542, %v519, %v528
        %v544 = vsel %vm542, %v521, %v530
        %vm545 = vcmask 523264
        %v546 = vsel %vm545, %v543, %v537
        %v547 = vsel %vm545, %v544, %v539
        %v549 = vlaneseq
        %v550 = vshrl.u32 %v549, 7
        %v551 = vsub.s32 0, %v550
        %v552 = vrot.slane %v511, %v551
        %vm554 = vcmask 785408
        %v556 = vsel %vm554, %v546, 0
        %v559 = vsel %vm554, %v547, 0
        %561 = vmatprep.subr.mxu0 0.0
        %562 = vmatpush1.msra.mxu0 %v499
        %563 = vmatprep.subr.mxu0 0.0
        %564 = vmatpush1.msra.mxu0 %v500
        %565 = vmatprep.subr.mxu0 0.0
        %566 = vmatpush1.msra.mxu0 %v501
        %567 = vmatprep.subr.mxu0 0.0
        %568 = vmatpush1.msra.mxu0 %v502
        %569 = vmatprep.subr.mxu0 0.0
        %570 = vmatpush1.msra.mxu0 %v503
        %571 = vmatprep.subr.mxu0 0.0
        %572 = vmatpush1.msra.mxu0 %v504
        %573 = vmatprep.subr.mxu0 0.0
        %574 = vmatpush1.msra.mxu0 %v505
        %575 = vmatprep.subr.mxu0 0.0
        %576 = vmatpush1.msra.mxu0 %v506
        %577 = vmatprep.subr.mxu0 0.0
        %578 = vmatpush1.msra.mxu0 %v507
        %579 = vmatprep.subr.mxu0 0.0
        %580 = vmatpush1.msra.mxu0 %v508
        %581 = vmatprep.subr.mxu0 0.0
        %582 = vmatpush1.msra.mxu0 %v509
        %583 = vmatprep.subr.mxu0 0.0
        %584 = vmatpush1.msra.mxu0 %v510
        %585 = vmatprep.subr.mxu0 0.0
        %586 = vmatpush1.msra.mxu0 0.0
        %587 = vmatprep.subr.mxu0 0.0
        %588 = vmatpush1.msra.mxu0 0.0
        %589 = vmatprep.subr.mxu0 0.0
        %590 = vmatpush1.msra.mxu0 0.0
        %591 = vmatprep.subr.mxu0 0.0
        %592 = vmatpush1.msra.mxu0 0.0
        %593 = vmatprep.subr.mxu0 0.0
        %594 = vmatpush1.msra.mxu0 0.0
        %595 = vmatprep.subr.mxu0 0.0
        %596 = vmatpush1.msra.mxu0 0.0
        %597 = vmatprep.subr.mxu0 0.0
        %598 = vmatpush1.msra.mxu0 0.0
        %599 = vmatprep.subr.mxu0 0.0
        %600 = vmatpush1.msra.mxu0 0.0
        %601 = vmatprep.subr.mxu0 0.0
        %602 = vmatpush1.msra.mxu0 0.0
        %603 = vmatprep.subr.mxu0 0.0
        %604 = vmatpush1.msra.mxu0 0.0
        %605 = vmatprep.subr.mxu0 0.0
        %606 = vmatpush1.msra.mxu0 0.0
        %607 = vmatprep.subr.mxu0 0.0
        %608 = vmatpush1.msra.mxu0 0.0
        %609 = vmatprep.subr.mxu0 0.0
        %610 = vmatpush1.msra.mxu0 0.0
        %611 = vmatprep.subr.mxu0 0.0
        %612 = vmatpush1.msra.mxu0 0.0
        %613 = vmatprep.subr.mxu0 0.0
        %614 = vmatpush1.msra.mxu0 0.0
        %615 = vmatprep.subr.mxu0 0.0
        %616 = vmatpush1.msra.mxu0 0.0
        %617 = vmatprep.subr.mxu0 0.0
        %618 = vmatpush1.msra.mxu0 0.0
        %619 = vmatprep.subr.mxu0 0.0
        %620 = vmatpush1.msra.mxu0 0.0
        %621 = vmatprep.subr.mxu0 0.0
        %622 = vmatpush1.msra.mxu0 0.0
        %623 = vmatprep.subr.mxu0 0.0
        %624 = vmatpush1.msra.mxu0 0.0
        %625 = vmatprep.mubr.f32.mxu0 0.0
        %626 = vmatmul.mubr.f32.gmra.mrb[0].mxu0 %v556
        %v627 = vpop.f32.mrb[0].mxu0
        %v628 = vadd.f32 %v552, %v627
        %v629 = vpop.f32.mrb[0].mxu0
        %630 = vmatprep.mubr.f32.mxu0 0.0
        %631 = vmatmul.mubr.f32.gmra.mrb[0].mxu0 %v559
        %v632 = vpop.f32.mrb[0].mxu0
        %v633 = vadd.f32 %v552, %v632
        %v634 = vpop.f32.mrb[0].mxu0
        %635 = vdwg.mxu0
        %v636 = vmax.f32 %v628, 0.0
        %v637 = vmax.f32 %v633, 0.0
        %v638 = vld [vmem:[#allocation2] sm:$0xff]
        %v639 = vld [vmem:[#allocation2 + $0x8] sm:$0xff]
        %v640 = vld [vmem:[#allocation2 + $0x10] sm:$0xff]
        %v641 = vld [vmem:[#allocation2 + $0x18] sm:$0xff]
        %v642 = vld [vmem:[#allocation2 + $0x20] sm:$0xff]
        %v643 = vld [vmem:[#allocation2 + $0x28] sm:$0xff]
        %v644 = vld [vmem:[#allocation2 + $0x30] sm:$0xff]
        %v645 = vld [vmem:[#allocation2 + $0x38] sm:$0xff]
        %v646 = vld [vmem:[#allocation2 + $0x40] sm:$0xff]
        %v647 = vld [vmem:[#allocation2 + $0x48] sm:$0xff]
        %v648 = vld [vmem:[#allocation2 + $0x50] sm:$0xff]
        %v649 = vld [vmem:[#allocation2 + $0x58] sm:$0xff]
        %v650 = vld [vmem:[#allocation2 + $0x60] sm:$0xff]
        %v651 = vld [vmem:[#allocation2 + $0x68] sm:$0xff]
        %v652 = vld [vmem:[#allocation2 + $0x70] sm:$0xff]
        %v653 = vld [vmem:[#allocation2 + $0x78] sm:$0xff]
        %v654 = vld [vmem:[#allocation2 + $0x80] sm:$0xff]
        %v655 = vld [vmem:[#allocation2 + $0x88] sm:$0xff]
        %v656 = vld [vmem:[#allocation2 + $0x90] sm:$0xff]
        %v657 = vld [vmem:[#allocation2 + $0x98] sm:$0xff]
        %v658 = vld [vmem:[#allocation2 + $0xa0] sm:$0xff]
        %v659 = vld [vmem:[#allocation2 + $0xa8] sm:$0xff]
        %v660 = vld [vmem:[#allocation2 + $0xb0] sm:$0xff]
        %v661 = vld [vmem:[#allocation2 + $0xb8] sm:$0xff]
        %v662 = vld [vmem:[%s6] sm:$0x1]
        %v665 = vrot.slane %v636, 7
        %v666 = vrot.slane %v637, 7
        %v667 = vsel %vm367, %v665, %v666
        %v670 = vsel %vm367, 0.0, %v665
        %vm671 = vcmask 1044480
        %v672 = vsel %vm671, %v667, 0.0
        %v675 = vrot.slane %v670, 2
        %v676 = vrot.slane %v672, 2
        %v677 = vsel %vm377, %v675, %v676
        %678 = vrot.lane.b32.xlu0 %v677, 64
        %v679 = vpop.permute.xlu0 %678
        %680 = vrot.lane.b32.xlu0 %v676, 64
        %v681 = vpop.permute.xlu0 %680
        %v684 = vrot.slane %v670, 4
        %v685 = vrot.slane %v672, 4
        %v686 = vsel %vm388, %v684, %v685
        %v687 = vsel %vm545, %v670, %v679
        %v688 = vsel %vm545, %v672, %v681
        %v690 = vlaneseq
        %v691 = vshrl.u32 %v690, 7
        %v692 = vsub.s32 0, %v691
        %v693 = vrot.slane %v662, %v692
        %v695 = vsel %vm545, %v686, 0
        %v697 = vsel %vm545, %v685, 0
        %699 = vmatprep.subr.mxu0 0.0
        %700 = vmatpush1.msra.mxu0 %v638
        %701 = vmatprep.subr.mxu0 0.0
        %702 = vmatpush1.msra.mxu0 %v639
        %703 = vmatprep.subr.mxu0 0.0
        %704 = vmatpush1.msra.mxu0 %v640
        %705 = vmatprep.subr.mxu0 0.0
        %706 = vmatpush1.msra.mxu0 %v641
        %707 = vmatprep.subr.mxu0 0.0
        %708 = vmatpush1.msra.mxu0 %v642
        %709 = vmatprep.subr.mxu0 0.0
        %710 = vmatpush1.msra.mxu0 %v643
        %711 = vmatprep.subr.mxu0 0.0
        %712 = vmatpush1.msra.mxu0 %v644
        %713 = vmatprep.subr.mxu0 0.0
        %714 = vmatpush1.msra.mxu0 %v645
        %715 = vmatprep.subr.mxu0 0.0
        %716 = vmatpush1.msra.mxu0 %v646
        %717 = vmatprep.subr.mxu0 0.0
        %718 = vmatpush1.msra.mxu0 %v647
        %719 = vmatprep.subr.mxu0 0.0
        %720 = vmatpush1.msra.mxu0 %v648
        %721 = vmatprep.subr.mxu0 0.0
        %722 = vmatpush1.msra.mxu0 %v649
        %723 = vmatprep.subr.mxu0 0.0
        %724 = vmatpush1.msra.mxu0 %v650
        %725 = vmatprep.subr.mxu0 0.0
        %726 = vmatpush1.msra.mxu0 %v651
        %727 = vmatprep.subr.mxu0 0.0
        %728 = vmatpush1.msra.mxu0 %v652
        %729 = vmatprep.subr.mxu0 0.0
        %730 = vmatpush1.msra.mxu0 %v653
        %731 = vmatprep.subr.mxu0 0.0
        %732 = vmatpush1.msra.mxu0 %v654
        %733 = vmatprep.subr.mxu0 0.0
        %734 = vmatpush1.msra.mxu0 %v655
        %735 = vmatprep.subr.mxu0 0.0
        %736 = vmatpush1.msra.mxu0 %v656
        %737 = vmatprep.subr.mxu0 0.0
        %738 = vmatpush1.msra.mxu0 %v657
        %739 = vmatprep.subr.mxu0 0.0
        %740 = vmatpush1.msra.mxu0 %v658
        %741 = vmatprep.subr.mxu0 0.0
        %742 = vmatpush1.msra.mxu0 %v659
        %743 = vmatprep.subr.mxu0 0.0
        %744 = vmatpush1.msra.mxu0 %v660
        %745 = vmatprep.subr.mxu0 0.0
        %746 = vmatpush1.msra.mxu0 %v661
        %747 = vmatprep.subr.mxu0 0.0
        %748 = vmatpush1.msra.mxu0 0.0
        %749 = vmatprep.subr.mxu0 0.0
        %750 = vmatpush1.msra.mxu0 0.0
        %751 = vmatprep.subr.mxu0 0.0
        %752 = vmatpush1.msra.mxu0 0.0
        %753 = vmatprep.subr.mxu0 0.0
        %754 = vmatpush1.msra.mxu0 0.0
        %755 = vmatprep.subr.mxu0 0.0
        %756 = vmatpush1.msra.mxu0 0.0
        %757 = vmatprep.subr.mxu0 0.0
        %758 = vmatpush1.msra.mxu0 0.0
        %759 = vmatprep.subr.mxu0 0.0
        %760 = vmatpush1.msra.mxu0 0.0
        %761 = vmatprep.subr.mxu0 0.0
        %762 = vmatpush1.msra.mxu0 0.0
        %763 = vmatprep.mubr.f32.mxu0 %v695
        %764 = vmatmul.mubr.f32.gmra.mrb[0].mxu0 %v687
        %v765 = vpop.f32.mrb[0].mxu0
        %v766 = vadd.f32 %v693, %v765
        %v767 = vpop.f32.mrb[0].mxu0
        %768 = vmatprep.mubr.f32.mxu0 %v697
        %769 = vmatmul.mubr.f32.gmra.mrb[0].mxu0 %v688
        %v770 = vpop.f32.mrb[0].mxu0
        %v771 = vadd.f32 %v693, %v770
        %v772 = vpop.f32.mrb[0].mxu0
        %773 = vdwg.mxu0
        %v774 = vmax.f32 %v766, 0.0
        %v775 = vmax.f32 %v771, 0.0
        %vm776 = vcmask 1041408
        %v777 = vsel %vm776, %v775, 0.0
        %v778 = vadd.f32 %v774, %v777
        %v779 = vrot.slane %v778, 4
        %v780 = vadd.f32 %v778, %v779
        %v781 = vrot.slane %v780, 2
        %v782 = vadd.f32 %v780, %v781
        %v783 = vrot.slane %v782, 1
        %v784 = vadd.f32 %v782, %v783
        %v785 = vmul.f32 %v784, 0.1
        %v786 = vld [vmem:[#allocation5] sm:$0xff]
        %v787 = vld [vmem:[#allocation5 + $0x8] sm:$0xff]
        %v788 = vld [vmem:[#allocation5 + $0x10] sm:$0xff]
        %v789 = vld [vmem:[#allocation5 + $0x18] sm:$0xff]
        %v790 = vld [vmem:[#allocation5 + $0x20] sm:$0xff]
        %v791 = vld [vmem:[#allocation5 + $0x28] sm:$0xff]
        %v792 = vld [vmem:[#allocation5 + $0x30] sm:$0xff]
        %v793 = vld [vmem:[#allocation5 + $0x38] sm:$0xff]
        %v794 = vld [vmem:[#allocation5 + $0x40] sm:$0xff]
        %v795 = vld [vmem:[#allocation5 + $0x48] sm:$0xff]
        %v796 = vld [vmem:[#allocation5 + $0x50] sm:$0xff]
        %v797 = vld [vmem:[#allocation5 + $0x58] sm:$0xff]
        %v798 = vld [vmem:[#allocation5 + $0x60] sm:$0xff]
        %v799 = vld [vmem:[#allocation5 + $0x68] sm:$0xff]
        %v800 = vld [vmem:[#allocation5 + $0x70] sm:$0xff]
        %v801 = vld [vmem:[#allocation5 + $0x78] sm:$0xff]
        %v802 = vld [vmem:[%s8] sm:$0x1]
        %803 = vmatprep.subr.mxu0 0.0
        %804 = vmatpush1.msra.mxu0 %v786
        %805 = vmatprep.subr.mxu0 0.0
        %806 = vmatpush1.msra.mxu0 %v787
        %807 = vmatprep.subr.mxu0 0.0
        %808 = vmatpush1.msra.mxu0 %v788
        %809 = vmatprep.subr.mxu0 0.0
        %810 = vmatpush1.msra.mxu0 %v789
        %811 = vmatprep.subr.mxu0 0.0
        %812 = vmatpush1.msra.mxu0 %v790
        %813 = vmatprep.subr.mxu0 0.0
        %814 = vmatpush1.msra.mxu0 %v791
        %815 = vmatprep.subr.mxu0 0.0
        %816 = vmatpush1.msra.mxu0 %v792
        %817 = vmatprep.subr.mxu0 0.0
        %818 = vmatpush1.msra.mxu0 %v793
        %819 = vmatprep.subr.mxu0 0.0
        %820 = vmatpush1.msra.mxu0 %v794
        %821 = vmatprep.subr.mxu0 0.0
        %822 = vmatpush1.msra.mxu0 %v795
        %823 = vmatprep.subr.mxu0 0.0
        %824 = vmatpush1.msra.mxu0 %v796
        %825 = vmatprep.subr.mxu0 0.0
        %826 = vmatpush1.msra.mxu0 %v797
        %827 = vmatprep.subr.mxu0 0.0
        %828 = vmatpush1.msra.mxu0 %v798
        %829 = vmatprep.subr.mxu0 0.0
        %830 = vmatpush1.msra.mxu0 %v799
        %831 = vmatprep.subr.mxu0 0.0
        %832 = vmatpush1.msra.mxu0 %v800
        %833 = vmatprep.subr.mxu0 0.0
        %834 = vmatpush1.msra.mxu0 %v801
        %835 = vmatprep.subr.mxu0 0.0
        %836 = vmatpush1.msra.mxu0 0.0
        %837 = vmatprep.subr.mxu0 0.0
        %838 = vmatpush1.msra.mxu0 0.0
        %839 = vmatprep.subr.mxu0 0.0
        %840 = vmatpush1.msra.mxu0 0.0
        %841 = vmatprep.subr.mxu0 0.0
        %842 = vmatpush1.msra.mxu0 0.0
        %843 = vmatprep.subr.mxu0 0.0
        %844 = vmatpush1.msra.mxu0 0.0
        %845 = vmatprep.subr.mxu0 0.0
        %846 = vmatpush1.msra.mxu0 0.0
        %847 = vmatprep.subr.mxu0 0.0
        %848 = vmatpush1.msra.mxu0 0.0
        %849 = vmatprep.subr.mxu0 0.0
        %850 = vmatpush1.msra.mxu0 0.0
        %851 = vmatprep.subr.mxu0 0.0
        %852 = vmatpush1.msra.mxu0 0.0
        %853 = vmatprep.subr.mxu0 0.0
        %854 = vmatpush1.msra.mxu0 0.0
        %855 = vmatprep.subr.mxu0 0.0
        %856 = vmatpush1.msra.mxu0 0.0
        %857 = vmatprep.subr.mxu0 0.0
        %858 = vmatpush1.msra.mxu0 0.0
        %859 = vmatprep.subr.mxu0 0.0
        %860 = vmatpush1.msra.mxu0 0.0
        %861 = vmatprep.subr.mxu0 0.0
        %862 = vmatpush1.msra.mxu0 0.0
        %863 = vmatprep.subr.mxu0 0.0
        %864 = vmatpush1.msra.mxu0 0.0
        %865 = vmatprep.subr.mxu0 0.0
        %866 = vmatpush1.msra.mxu0 0.0
        %867 = vmatprep.mubr.f32.mxu0 0.0
        %868 = vmatmul.mubr.f32.gmra.mrb[0].mxu0 %v785
        %v869 = vpop.f32.mrb[0].mxu0
        %v870 = vadd.f32 %v802, %v869
        %v871 = vpop.f32.mrb[0].mxu0
        %872 = vdwg.mxu0
        %873 = vst [vmem:[%s354] sm:$0x1] %v870
        %s874 = sand.u32 %s227, 1
        %s875 = scalar_lea.sflag [#allocation4], %s874
        %s876 = sand.u32 %s227, 1
        %s877 = scalar_lea.vmem [#allocation7], %s876
        // Predicated region
        $region65: #{tcn_encoder_forward.1} parent=55 // pred_check
          %p878 = pneg %p237
        $region66: #{tcn_encoder_forward.1} parent=55 // pred_check_branch
          %880 = sbr.rel (%p878) target = $region68
        $region67: #{tcn_encoder_forward.1} parent=55 // pred_region
          %s882 = ssub.s32 16, 16
          %883 = vsyncadd %s875, %s882
          %s884 = smul.addr %s25, 16
          %s885 = scalar_lea.hbm %s9, %s884
          %s887 = sshll.u32 %s877, 4
          %s888 = int_to_ptr.vmem [resolvable:$true] %s887
          %890 = dma.vmem_to_hbm [thread:$0]  %s888, 16, %s885, %s875
        $region68: #{tcn_encoder_forward.1} parent=55 // pred_fallthru
          _
      $region56: #{tcn_encoder_forward.1} parent=5 // pred_fallthru
        _
      %p891 = scmp.le.s32.totalorder 2, %s20
      // Predicated region
      $region69: #{tcn_encoder_forward.1} parent=5 // pred_check
        %p892 = pneg %p891
      $region70: #{tcn_encoder_forward.1} parent=5 // pred_check_branch
        %894 = sbr.rel (%p892) target = $region72
      $region71: #{tcn_encoder_forward.1} parent=5 // pred_region
        %s895 = ssub.s32 %s20, 2
        // Predicated region
        $region73: #{tcn_encoder_forward.1} parent=71 // pred_check
          %p896 = pneg %p243
        $region74: #{tcn_encoder_forward.1} parent=71 // pred_check_branch
          %898 = sbr.rel (%p896) target = $region76
        $region75: #{tcn_encoder_forward.1} parent=71 // pred_region
          %s899 = sand.u32 %s228, 1
          %s900 = scalar_lea.sflag [#allocation4], %s899
          %s901 = sand.u32 %s228, 1
          %s902 = scalar_lea.vmem [#allocation7], %s901
          %903 = dma.done %s900, 16
        $region76: #{tcn_encoder_forward.1} parent=71 // pred_fallthru
          _
      $region72: #{tcn_encoder_forward.1} parent=5 // pred_fallthru
        _
    $region6: #{tcn_encoder_forward.1} parent=1 // loop_footer
      %s24 = sadd.s32 1, %s20
    $region7: #{tcn_encoder_forward.1} parent=1 // loop_footer_branch
      %19 = sbr.rel target = $region3
    $region8: #{tcn_encoder_forward.1} parent=1 // loop_exit
      _
    %904 = vsyncpa [#allocation3], 1
    %s905 = scalar_lea.sflag [#allocation3], 1
    %906 = vsyncpa %s905, 1
    %907 = vsyncpa [#allocation6], 1
    %908 = vsyncpa [#allocation4], 1
    %s909 = scalar_lea.sflag [#allocation4], 1
    %910 = vsyncpa %s909, 1

</llo_original>
